<compile_context>
chip_gen: v6e
topology: v6e:2x2x1
jax: 0.10.0
libtpu: 0.0.40
codegen_flags: <defaults>
</compile_context>

<pallas_src>
import functools

import jax
import jax.numpy as jnp
from jax import lax
from jax.experimental import pallas as pl
from jax.experimental.pallas import tpu as pltpu


def _round_up(x, m):
    return (x + m - 1) // m * m


def _kernel_offsets(ks=3, dilation=1):
    r = ks // 2
    offs = [(dx * dilation, dy * dilation, dz * dilation)
            for dx in range(-r, r + 1)
            for dy in range(-r, r + 1)
            for dz in range(-r, r + 1)]
    return jnp.array(offs, dtype=jnp.int32)  # (K, 3)


def _build_neighbor_indices(coords, offsets):
    """nbr[i, k] = j such that coords[j] == coords[i] + offsets[k] (same batch), else N (miss)."""
    n = coords.shape[0]
    cmin = coords.min(axis=0)
    c = coords - cmin                                   # nonnegative coords
    ext = jnp.max(jnp.abs(offsets))                     # max spatial shift (= r * dilation)
    dims = c.max(axis=0) + 1
    sx = dims[1] + 2 * ext
    sy = dims[2] + 2 * ext
    sz = dims[3] + 2 * ext

    # TODO(synk): the int32 key overflows for very large grids / many batches
    # (product of padded extents > 2^31); switch to int64 keys (or a two-level
    # (batch, xyz) compare) for production-scale point clouds.
    def encode(b, x, y, z):
        return ((b * sx + x) * sy + y) * sz + z

    key = encode(c[:, 0], c[:, 1] + ext, c[:, 2] + ext, c[:, 3] + ext)          # (N,)
    order = jnp.argsort(key)
    skey = key[order]

    q = c[:, None, 1:] + offsets[None, :, :] + ext                              # (N, K, 3), >= 0
    qkey = encode(c[:, None, 0], q[..., 0], q[..., 1], q[..., 2])               # (N, K)
    pos = jnp.clip(jnp.searchsorted(skey, qkey), 0, n - 1)
    hit = skey[pos] == qkey
    return jnp.where(hit, order[pos], n)                                        # (N, K) int32


def _conv_partial_stats_kernel(g_ref, w_ref, y_ref, s_ref):
    # Single MXU dot per N-tile (bf16 operands, f32 accumulation).
    y = jnp.dot(g_ref[...], w_ref[...], preferred_element_type=jnp.float32)     # (tn, Cp) f32
    # Per-tile partial batch statistics from the f32 accumulator (before the bf16 downcast),
    # stored with direct 2-D slice writes (no in-kernel concatenate / reshape).
    s_ref[0, 0:1, :] = jnp.sum(y, axis=0, keepdims=True)
    s_ref[0, 1:2, :] = jnp.sum(y * y, axis=0, keepdims=True)
    # Downcast only the stored intermediate; stats stay exact.
    y_ref[...] = y.astype(y_ref.dtype)


def _bn_relu_kernel(y_ref, scale_ref, shift_ref, o_ref):
    # scale/shift were precomputed in JAX (gamma*rsqrt(var+eps), beta-mean*scale):
    # pass 2 is a pure fused multiply-add + ReLU on the streamed bf16 intermediate.
    y = y_ref[...].astype(jnp.float32)
    o_ref[...] = jnp.maximum(y * scale_ref[...] + shift_ref[...], 0.0).astype(o_ref.dtype)


def basic_sparse_convolution_block(coords, feats, weight, gamma, beta, *,
                                   ks=3, dilation=1, eps=1e-5, block_rows=512):
    """stride=1 submanifold sparse conv (output coords == input coords) + BN (batch stats) + ReLU."""
    n, c_in = feats.shape
    k, _, c_out = weight.shape
    offsets = _kernel_offsets(ks, dilation)
    assert offsets.shape[0] == k

    # ---- kernel map + row gather (XLA glue, bf16 slab) -------------------------------------
    # TODO(synk): move the row gather inside pass 1 (scalar-prefetched neighbour indices +
    # a vectorized VMEM / DMA gather) to eliminate the K-inflated slab entirely; a scalar
    # per-row gather loop in-kernel is slower than streaming this bf16 slab, so the slab is
    # kept (at half the previous bytes) until a vectorized sublane-gather path is used.
    nbr = _build_neighbor_indices(coords, offsets)                                  # (N, K)
    feats_bf16 = feats.astype(jnp.bfloat16)
    feats_ext = jnp.concatenate(
        [feats_bf16, jnp.zeros((1, c_in), jnp.bfloat16)], axis=0)                   # sentinel row
    g = feats_ext[nbr].reshape(n, k * c_in)                                         # (N, K*C_in) bf16

    # ---- pad to lane-dense / tile-friendly shapes -------------------------------------------
    kc = k * c_in
    kc_pad = _round_up(kc, 128)     # 128-deep contraction tile (matches the v5e MXU exactly;
    c_pad = _round_up(c_out, 128)   # do NOT widen to 256 — it would double HBM bytes)

    # Per-generation VMEM budget: ~75% of capacity (96 MiB on v5e/v6e, 48 MiB on v7x);
    # conservative 48 MiB fallback if the query is unavailable.
    try:
        vmem_cap = int(pltpu.get_tpu_info().vmem_capacity_bytes)
    except Exception:  # pragma: no cover - query not available in all environments
        vmem_cap = 64 << 20
    budget = int(min(0.75 * vmem_cap, 100 << 20))

    def pass1_vmem(tn_):
        return (2 * tn_ * kc_pad * 2        # bf16 gathered-operand tile, double-buffered
                + 2 * kc_pad * c_pad * 2    # bf16 folded weight (Pallas double-buffers it too)
                + 2 * tn_ * c_pad * 2       # bf16 conv-output tile, double-buffered
                + 2 * 2 * c_pad * 4         # partial-stat rows
                + tn_ * c_pad * 4)          # f32 accumulator / compiler scratch headroom

    # Largest N-tile (multiple of 16 for bf16 sublane packing) that fits the budget.
    tn = _round_up(min(block_rows, max(n, 16)), 16)
    while tn > 16 and pass1_vmem(tn) > budget:
        tn = _round_up(tn // 2, 16)
    n_pad = _round_up(n, tn)
    n_tiles = n_pad // tn

    g_pad = jnp.zeros((n_pad, kc_pad), jnp.bfloat16).at[:n, :kc].set(g)
    w_pad = jnp.zeros((kc_pad, c_pad), jnp.bfloat16).at[:kc, :c_out].set(
        weight.reshape(kc, c_out).astype(jnp.bfloat16))

    vmem1 = int(min(max(2 * pass1_vmem(tn), 16 << 20), budget))

    # ---- pass 1: tiled conv matmul + per-tile partial BN statistics -------------------------
    # TODO(synk): single-buffer the constant-index weight block (pipeline_mode=pl.Buffered(1))
    # on v7x; its 2x footprint is already accounted for in pass1_vmem above.
    y_pad, part = pl.pallas_call(
        _conv_partial_stats_kernel,
        out_shape=(jax.ShapeDtypeStruct((n_pad, c_pad), jnp.bfloat16),
                   jax.ShapeDtypeStruct((n_tiles, 2, c_pad), jnp.float32)),
        grid_spec=pltpu.PrefetchScalarGridSpec(
            num_scalar_prefetch=0,
            grid=(n_tiles,),
            in_specs=[
                pl.BlockSpec((tn, kc_pad), lambda i: (i, 0)),       # gathered features (tiled N)
                pl.BlockSpec((kc_pad, c_pad), lambda i: (0, 0)),    # folded weight, VMEM-resident
            ],
            out_specs=[
                pl.BlockSpec((tn, c_pad), lambda i: (i, 0)),        # bf16 conv output (lane-dense)
                pl.BlockSpec((1, 2, c_pad), lambda i: (i, 0, 0)),   # per-tile [sum, sumsq]
            ],
        ),
        compiler_params=pltpu.CompilerParams(
            dimension_semantics=("parallel",),                      # megacore over N-tiles (v7x)
            vmem_limit_bytes=vmem1,
        ),
    )(g_pad, w_pad)

    # ---- tiny cross-tile reduction for training-mode batch statistics -----------------------
    total = jnp.sum(part, axis=0)                                   # (2, C_pad) f32
    mean = total[0] / n                                             # padded rows contribute 0
    var = jnp.maximum(total[1] / n - mean * mean, 0.0)              # biased variance (training)
    # TODO(synk): E[y^2]-mean^2 can cancel catastrophically for large-mean activations;
    # switch to a centered second pass / Welford if that regime matters.

    gamma_pad = jnp.zeros((c_pad,), jnp.float32).at[:c_out].set(gamma.astype(jnp.float32))
    beta_pad = jnp.zeros((c_pad,), jnp.float32).at[:c_out].set(beta.astype(jnp.float32))
    scale = (gamma_pad * lax.rsqrt(var + eps)).reshape(1, c_pad)
    shift = (beta_pad - mean * scale[0]).reshape(1, c_pad)

    vmem2 = int(min(max(2 * (2 * tn * c_pad * 2 + 2 * tn * c_pad * 4 + 4 * c_pad * 4),
                        16 << 20), budget))

    # ---- pass 2: tiled fused scale/shift + ReLU ----------------------------------------------
    out_pad = pl.pallas_call(
        _bn_relu_kernel,
        out_shape=jax.ShapeDtypeStruct((n_pad, c_pad), feats.dtype),
        grid_spec=pltpu.PrefetchScalarGridSpec(
            num_scalar_prefetch=0,
            grid=(n_tiles,),
            in_specs=[
                pl.BlockSpec((tn, c_pad), lambda i: (i, 0)),        # bf16 conv output tile
                pl.BlockSpec((1, c_pad), lambda i: (0, 0)),         # precomputed scale
                pl.BlockSpec((1, c_pad), lambda i: (0, 0)),         # precomputed shift
            ],
            out_specs=pl.BlockSpec((tn, c_pad), lambda i: (i, 0)),
        ),
        compiler_params=pltpu.CompilerParams(
            dimension_semantics=("parallel",),
            vmem_limit_bytes=vmem2,
        ),
    )(y_pad, scale, shift)

    # TODO(synk): downstream consumers could take the padded buffer directly and slice lazily
    # to avoid the compaction copy this slice forces.
    return out_pad[:n, :c_out]


def _reference(coords, feats, weight, gamma, beta, *, ks=3, dilation=1, eps=1e-5):
    """Independent dense-match reference (exact where-based gather, full f32)."""
    offsets = _kernel_offsets(ks, dilation)
    shifted = coords[:, None, 1:] + offsets[None, :, :]                         # (N, K, 3)
    same_xyz = (coords[None, None, :, 1:] == shifted[:, :, None, :]).all(-1)    # (N, K, N)
    same_b = coords[None, None, :, 0] == coords[:, None, None, 0]               # (N, 1, N)
    match = same_xyz & same_b                                                   # (N, K, N)
    g = jnp.where(match[..., None], feats[None, None, :, :], 0.0).sum(axis=2)   # (N, K, C_in)
    y = jnp.einsum("nkc,kco->no", g, weight)
    mean = y.mean(0, keepdims=True)
    var = ((y - mean) ** 2).mean(0, keepdims=True)
    xhat = (y - mean) / jnp.sqrt(var + eps)
    return jnp.maximum(gamma * xhat + beta, 0.0)


if __name__ == "__main__":
    key = jax.random.PRNGKey(0)
    k_coord, k_feat, k_w = jax.random.split(key, 3)

    # Small synthetic sparse tensor: batch=2, 8^3 spatial grid, 32 unique points per batch.
    B, S, NPB = 2, 8, 32
    INC, OUTC, KS = 4, 8, 3

    coord_rows = []
    for b in range(B):
        flat = jax.random.choice(
            jax.random.fold_in(k_coord, b), S * S * S, shape=(NPB,), replace=False
        )
        x = flat % S
        y = (flat // S) % S
        z = flat // (S * S)
        bcol = jnp.full((NPB,), b, dtype=jnp.int32)
        coord_rows.append(jnp.stack([bcol, x, y, z], axis=1).astype(jnp.int32))
    coords = jnp.concatenate(coord_rows, axis=0)                        # (64, 4) int32
    feats = jax.random.normal(k_feat, (B * NPB, INC), jnp.float32)      # (64, 4)

    # Deterministic parameter init (shapes from the module's __init__):
    #   spnn.Conv3d(inc=4, outc=8, ks=3): weight (27, 4, 8)
    #   spnn.BatchNorm(8): gamma=1, beta=0 (training mode -> batch statistics)
    K = KS * KS * KS
    fan_in = K * INC
    weight = jax.random.normal(k_w, (K, INC, OUTC), jnp.float32) * (1.0 / jnp.sqrt(fan_in))
    gamma = jnp.ones((OUTC,), jnp.float32)
    beta = jnp.zeros((OUTC,), jnp.float32)

    out = basic_sparse_convolution_block(coords, feats, weight, gamma, beta, ks=KS)
    out = jax.block_until_ready(out)

    ref = _reference(coords, feats, weight, gamma, beta, ks=KS)
    assert out.shape == (B * NPB, OUTC)
    # Tolerance covers the bf16 operands / bf16 stored intermediate (the BN statistics and the
    # matmul accumulation stay f32, but the normalized output amplifies bf16 rounding by 1/std).
    assert jnp.allclose(out, ref, atol=3e-2, rtol=3e-2)

    print("KERNEL_OK")
</pallas_src>

<mosaic_0001>
module attributes {stable_mosaic.version = 11 : i64} {
  func.func @_conv_partial_stats_kernel(%arg0: i32, %arg1: memref<64x128xbf16, #tpu.memory_space<vmem>>, %arg2: memref<128x128xbf16, #tpu.memory_space<vmem>>, %arg3: memref<64x128xbf16, #tpu.memory_space<vmem>>, %arg4: memref<1x2x128xf32, #tpu.memory_space<vmem>>) attributes {dimension_semantics = [#tpu.dimension_semantics<parallel>], iteration_bounds = array<i64: 1>, scalar_prefetch = 0 : i64, scratch_operands = 0 : i64, tpu.core_type = #tpu.core_type<tc>, window_params = [{transform_indices = @transform_0, window_bounds = array<i64: 64, 128>}, {pipeline_mode = #tpu.pipeline_mode<synchronous>, transform_indices = @transform_1, window_bounds = array<i64: 128, 128>}, {transform_indices = @transform_2, window_bounds = array<i64: 64, 128>}, {transform_indices = @transform_3, window_bounds = array<i64: 1, 2, 128>}]} {
    %c0 = arith.constant 0 : index
    %c0_0 = arith.constant 0 : index
    %0 = vector.load %arg1[%c0, %c0_0] : memref<64x128xbf16, #tpu.memory_space<vmem>>, vector<64x128xbf16>
    %c0_1 = arith.constant 0 : index
    %c0_2 = arith.constant 0 : index
    %1 = vector.load %arg2[%c0_1, %c0_2] : memref<128x128xbf16, #tpu.memory_space<vmem>>, vector<128x128xbf16>
    %cst = arith.constant dense<0.000000e+00> : vector<64x128xf32>
    %2 = tpu.matmul %0, %1, %cst {dimension_numbers = #tpu.dot_dimension_numbers<[1], [0], [0], [1], [0, 0, 1, 1], [], []>} : vector<64x128xbf16>, vector<128x128xbf16>, vector<64x128xf32> -> vector<64x128xf32>
    %cst_3 = arith.constant dense<0.000000e+00> : vector<128xf32>
    %3 = vector.multi_reduction <add>, %2, %cst_3 [0] : vector<64x128xf32> to vector<128xf32>
    %4 = vector.shape_cast %3 : vector<128xf32> to vector<1x128xf32>
    %c0_4 = arith.constant 0 : index
    %c0_5 = arith.constant 0 : index
    %c0_6 = arith.constant 0 : index
    %5 = vector.load %arg4[%c0_4, %c0_5, %c0_6] : memref<1x2x128xf32, #tpu.memory_space<vmem>>, vector<1x1x128xf32>
    %6 = vector.shape_cast %5 : vector<1x1x128xf32> to vector<1x128xf32>
    %7 = vector.shape_cast %4 : vector<1x128xf32> to vector<1x1x128xf32>
    tpu.vector_store %arg4[%c0_4, %c0_5, %c0_6], %7 {strides = array<i32>} : memref<1x2x128xf32, #tpu.memory_space<vmem>>, vector<1x1x128xf32>,
    %8 = arith.mulf %2, %2 : vector<64x128xf32>
    %cst_7 = arith.constant dense<0.000000e+00> : vector<128xf32>
    %9 = vector.multi_reduction <add>, %8, %cst_7 [0] : vector<64x128xf32> to vector<128xf32>
    %10 = vector.shape_cast %9 : vector<128xf32> to vector<1x128xf32>
    %c0_8 = arith.constant 0 : index
    %c1 = arith.constant 1 : index
    %c0_9 = arith.constant 0 : index
    %11 = vector.load %arg4[%c0_8, %c1, %c0_9] : memref<1x2x128xf32, #tpu.memory_space<vmem>>, vector<1x1x128xf32>
    %12 = vector.shape_cast %11 : vector<1x1x128xf32> to vector<1x128xf32>
    %13 = vector.shape_cast %10 : vector<1x128xf32> to vector<1x1x128xf32>
    tpu.vector_store %arg4[%c0_8, %c1, %c0_9], %13 {strides = array<i32>} : memref<1x2x128xf32, #tpu.memory_space<vmem>>, vector<1x1x128xf32>,
    %14 = arith.truncf %2 : vector<64x128xf32> to vector<64x128xbf16>
    %c0_10 = arith.constant 0 : index
    %c0_11 = arith.constant 0 : index
    %15 = vector.load %arg3[%c0_10, %c0_11] : memref<64x128xbf16, #tpu.memory_space<vmem>>, vector<64x128xbf16>
    tpu.vector_store %arg3[%c0_10, %c0_11], %14 {strides = array<i32>} : memref<64x128xbf16, #tpu.memory_space<vmem>>, vector<64x128xbf16>,
    return
  }
  func.func @transform_0(%arg0: i32) -> (i32, i32) {
    %c0_i32 = arith.constant 0 : i32
    %c0_i32_0 = arith.constant 0 : i32
    return %arg0, %c0_i32 : i32, i32
  }
  func.func @transform_1(%arg0: i32) -> (i32, i32) {
    %c0_i32 = arith.constant 0 : i32
    %c0_i32_0 = arith.constant 0 : i32
    %c0_i32_1 = arith.constant 0 : i32
    return %c0_i32, %c0_i32_0 : i32, i32
  }
  func.func @transform_2(%arg0: i32) -> (i32, i32) {
    %c0_i32 = arith.constant 0 : i32
    %c0_i32_0 = arith.constant 0 : i32
    return %arg0, %c0_i32 : i32, i32
  }
  func.func @transform_3(%arg0: i32) -> (i32, i32, i32) {
    %c0_i32 = arith.constant 0 : i32
    %c0_i32_0 = arith.constant 0 : i32
    %c0_i32_1 = arith.constant 0 : i32
    return %arg0, %c0_i32, %c0_i32_0 : i32, i32, i32
  }
}

</mosaic_0001>

<llo_original>
// kernel: tpu_custom_call.1
$region0: #{tpu_custom_call.1}
  #allocation0 [shape = 'u32[]', space=smem, size = 0x4, offset = 0x4, fixed_abs, tag = 'smem constant byte address 0x4 - core index']
  #allocation1 [shape = 'u32[144,128]{1,0:T(1,128)}', space=vmem, size = 0x12000, scoped, tag = 'internal scratch']
  %s0 = inlined_call_operand.hbm [shape: bf16[64,128], index: 0, kind: input, shape index: {}]
  %s1 = inlined_call_operand.hbm [shape: bf16[128,128], index: 1, kind: input, shape index: {}]
  %s2 = inlined_call_operand.hbm [shape: bf16[64,128], index: 2, kind: output, shape index: {0}]
  %s3 = inlined_call_operand.hbm [shape: f32[1,2,128], index: 3, kind: output, shape index: {1}]
  %4 = xla_tuple %s2, %s3
  %s5 = sld [smem:[#allocation0]]
  $region34: #{tpu_custom_call.1} parent=0
    _
  %s7 = ssub.s32 1, %s5
  %s8 = scalar_select 0, %s7, %s5
  $region1: #{tpu_custom_call.1} parent=0
    #allocation2 [shape = 'u8[16384]{0}', space=vmem, size = 0x4000, scoped, tag = 'input window, operand 0, single buffered']
    #allocation3 [shape = 's32[1]{0}', space=sflag, size = 0x4, scoped, tag = 'scoped memory for tpu_custom_call.1']
    #allocation4 [shape = 's32[1]{0}', space=sflag, size = 0x4, scoped, tag = 'scoped memory for tpu_custom_call.1']
    #allocation5 [shape = 'u8[32768]{0}', space=vmem, size = 0x8000, scoped, tag = 'input window, operand 1, single buffered']
    #allocation6 [shape = 's32[1]{0}', space=sflag, size = 0x4, scoped, tag = 'scoped memory for tpu_custom_call.1']
    #allocation7 [shape = 'u8[16384]{0}', space=vmem, size = 0x4000, scoped, tag = 'output window, operand 0, single buffered']
    #allocation8 [shape = 'u8[1024]{0}', space=vmem, size = 0x400, scoped, tag = 'output window, operand 1, single buffered']
    #allocation9 [shape = 's32[1]{0}', space=sflag, size = 0x4, scoped, tag = 'scoped memory for tpu_custom_call.1']
    %9 = vsyncpa [#allocation3], 0
    %10 = vsyncpa [#allocation6], 0
    %11 = vsyncpa [#allocation4], 0
    %12 = vsyncpa [#allocation9], 0
    // Predicated region
    $region2: #{tpu_custom_call.1} parent=1 // pred_check
      _
    $region3: #{tpu_custom_call.1} parent=1 // pred_check_branch
      %14 = sbr.rel (0) target = $region5
    $region4: #{tpu_custom_call.1} parent=1 // pred_region
      %s16 = ssub.s32 512, 512
      %17 = vsyncadd [#allocation3], %s16
      %s18 = sshll.u32 [#allocation2], 4
      %s19 = int_to_ptr.vmem [resolvable:$true] %s18
      %24 = dma.hbm_to_vmem [thread:$0]  %s0, 512, %s19, [#allocation3], 64, 64, 4
    $region5: #{tpu_custom_call.1} parent=1 // pred_fallthru
      _
    // Predicated region
    $region6: #{tpu_custom_call.1} parent=1 // pred_check
      _
    $region7: #{tpu_custom_call.1} parent=1 // pred_check_branch
      %26 = sbr.rel (0) target = $region9
    $region8: #{tpu_custom_call.1} parent=1 // pred_region
      %s28 = ssub.s32 1024, 1024
      %29 = vsyncadd [#allocation6], %s28
      %s30 = sshll.u32 [#allocation5], 4
      %s31 = int_to_ptr.vmem [resolvable:$true] %s30
      %36 = dma.hbm_to_vmem [thread:$0]  %s1, 1024, %s31, [#allocation6], 64, 64, 4
    $region9: #{tpu_custom_call.1} parent=1 // pred_fallthru
      _
    // Predicated region
    $region10: #{tpu_custom_call.1} parent=1 // pred_check
      _
    $region11: #{tpu_custom_call.1} parent=1 // pred_check_branch
      %38 = sbr.rel (0) target = $region13
    $region12: #{tpu_custom_call.1} parent=1 // pred_region
      %39 = dma.done [#allocation3], 512
    $region13: #{tpu_custom_call.1} parent=1 // pred_fallthru
      _
    // Predicated region
    $region14: #{tpu_custom_call.1} parent=1 // pred_check
      _
    $region15: #{tpu_custom_call.1} parent=1 // pred_check_branch
      %41 = sbr.rel (0) target = $region17
    $region16: #{tpu_custom_call.1} parent=1 // pred_region
      %42 = dma.done [#allocation6], 1024
    $region17: #{tpu_custom_call.1} parent=1 // pred_fallthru
      _
    %v44 = vld [vmem:[#allocation2] sm:$0xf]
    %v45 = vld [vmem:[#allocation2 + $0x4] sm:$0xf]
    %v46 = vld [vmem:[#allocation2 + $0x8] sm:$0xf]
    %v47 = vld [vmem:[#allocation2 + $0xc] sm:$0xf]
    %v48 = vld [vmem:[#allocation2 + $0x10] sm:$0xf]
    %v49 = vld [vmem:[#allocation2 + $0x14] sm:$0xf]
    %v50 = vld [vmem:[#allocation2 + $0x18] sm:$0xf]
    %v51 = vld [vmem:[#allocation2 + $0x1c] sm:$0xf]
    %v52 = vld [vmem:[#allocation5] sm:$0xf]
    %v53 = vld [vmem:[#allocation5 + $0x4] sm:$0xf]
    %v54 = vld [vmem:[#allocation5 + $0x8] sm:$0xf]
    %v55 = vld [vmem:[#allocation5 + $0xc] sm:$0xf]
    %v56 = vld [vmem:[#allocation5 + $0x10] sm:$0xf]
    %v57 = vld [vmem:[#allocation5 + $0x14] sm:$0xf]
    %v58 = vld [vmem:[#allocation5 + $0x18] sm:$0xf]
    %v59 = vld [vmem:[#allocation5 + $0x1c] sm:$0xf]
    %v60 = vld [vmem:[#allocation5 + $0x20] sm:$0xf]
    %v61 = vld [vmem:[#allocation5 + $0x24] sm:$0xf]
    %v62 = vld [vmem:[#allocation5 + $0x28] sm:$0xf]
    %v63 = vld [vmem:[#allocation5 + $0x2c] sm:$0xf]
    %v64 = vld [vmem:[#allocation5 + $0x30] sm:$0xf]
    %v65 = vld [vmem:[#allocation5 + $0x34] sm:$0xf]
    %v66 = vld [vmem:[#allocation5 + $0x38] sm:$0xf]
    %v67 = vld [vmem:[#allocation5 + $0x3c] sm:$0xf]
    %v76 = vunpack.c.l.b16 %v44
    %v77 = vunpack.c.l.b16 %v45
    %v78 = vunpack.c.l.b16 %v46
    %v79 = vunpack.c.l.b16 %v47
    %v80 = vunpack.c.l.b16 %v48
    %v81 = vunpack.c.l.b16 %v49
    %v82 = vunpack.c.l.b16 %v50
    %v83 = vunpack.c.l.b16 %v51
    %v84 = vpack.c.b16 %v77, %v76
    %v85 = vpack.c.b16 %v79, %v78
    %v86 = vpack.c.b16 %v81, %v80
    %v87 = vpack.c.b16 %v83, %v82
    %v108 = vunpack.c.l.b16 %v52
    %v109 = vunpack.c.l.b16 %v53
    %v110 = vunpack.c.l.b16 %v54
    %v111 = vunpack.c.l.b16 %v55
    %v112 = vunpack.c.l.b16 %v56
    %v113 = vunpack.c.l.b16 %v57
    %v114 = vunpack.c.l.b16 %v58
    %v115 = vunpack.c.l.b16 %v59
    %v116 = vunpack.c.l.b16 %v60
    %v117 = vunpack.c.l.b16 %v61
    %v118 = vunpack.c.l.b16 %v62
    %v119 = vunpack.c.l.b16 %v63
    %v120 = vunpack.c.l.b16 %v64
    %v121 = vunpack.c.l.b16 %v65
    %v122 = vunpack.c.l.b16 %v66
    %v123 = vunpack.c.l.b16 %v67
    %v124 = vpack.c.b16 %v109, %v108
    %v125 = vpack.c.b16 %v111, %v110
    %v126 = vpack.c.b16 %v113, %v112
    %v127 = vpack.c.b16 %v115, %v114
    %v128 = vpack.c.b16 %v117, %v116
    %v129 = vpack.c.b16 %v119, %v118
    %v130 = vpack.c.b16 %v121, %v120
    %v131 = vpack.c.b16 %v123, %v122
    %140 = vmatprep.subr.bf16.mxu0 0
    %141 = vmatpush1.bf16.msra.mxu0 %v131
    %142 = vmatprep.subr.bf16.mxu0 0
    %143 = vmatpush1.bf16.msra.mxu0 %v130
    %144 = vmatprep.subr.bf16.mxu0 0
    %145 = vmatpush1.bf16.msra.mxu0 %v129
    %146 = vmatprep.subr.bf16.mxu0 0
    %147 = vmatpush1.bf16.msra.mxu0 %v128
    %148 = vmatprep.subr.bf16.mxu0 0
    %149 = vmatpush1.bf16.msra.mxu0 %v127
    %150 = vmatprep.subr.bf16.mxu0 0
    %151 = vmatpush1.bf16.msra.mxu0 %v126
    %152 = vmatprep.subr.bf16.mxu0 0
    %153 = vmatpush1.bf16.msra.mxu0 %v125
    %154 = vmatprep.subr.bf16.mxu0 0
    %155 = vmatpush1.bf16.msra.mxu0 %v124
    %156 = vmatprep.subr.bf16.mxu0 0
    %157 = vmatpush2.bf16.msra.mxu0 0
    %158 = vmatprep.subr.bf16.mxu0 0
    %159 = vmatpush2.bf16.msra.mxu0 0
    %160 = vmatprep.subr.bf16.mxu0 0
    %161 = vmatpush2.bf16.msra.mxu0 0
    %162 = vmatprep.subr.bf16.mxu0 0
    %163 = vmatpush2.bf16.msra.mxu0 0
    %164 = vmatprep.subr.bf16.mxu0 0
    %165 = vmatpush2.bf16.msra.mxu0 0
    %166 = vmatprep.subr.bf16.mxu0 0
    %167 = vmatpush2.bf16.msra.mxu0 0
    %168 = vmatprep.subr.bf16.mxu0 0
    %169 = vmatpush2.bf16.msra.mxu0 0
    %170 = vmatprep.subr.bf16.mxu0 0
    %171 = vmatpush2.bf16.msra.mxu0 0
    %172 = vmatprep.mubr.bf16.mxu0 0
    %173 = vmatmul.mubr.bf16.gmra.mxu0 %v84
    %v174 = vpop.f32.mrf.mxu0
    %v175 = vadd.f32 0.0, %v174
    %v176 = vpop.f32.mrf.mxu0
    %v177 = vpop.f32.mrf.mxu0
    %v178 = vadd.f32 0.0, %v177
    %v179 = vpop.f32.mrf.mxu0
    %180 = vmatprep.mubr.bf16.mxu0 0
    %181 = vmatmul.mubr.bf16.gmra.mxu0 %v85
    %v182 = vpop.f32.mrf.mxu0
    %v183 = vadd.f32 0.0, %v182
    %v184 = vpop.f32.mrf.mxu0
    %v185 = vpop.f32.mrf.mxu0
    %v186 = vadd.f32 0.0, %v185
    %v187 = vpop.f32.mrf.mxu0
    %188 = vmatprep.mubr.bf16.mxu0 0
    %189 = vmatmul.mubr.bf16.gmra.mxu0 %v86
    %v190 = vpop.f32.mrf.mxu0
    %v191 = vadd.f32 0.0, %v190
    %v192 = vpop.f32.mrf.mxu0
    %v193 = vpop.f32.mrf.mxu0
    %v194 = vadd.f32 0.0, %v193
    %v195 = vpop.f32.mrf.mxu0
    %196 = vmatprep.mubr.bf16.mxu0 0
    %197 = vmatmul.mubr.bf16.gmra.mxu0 %v87
    %v198 = vpop.f32.mrf.mxu0
    %v199 = vadd.f32 0.0, %v198
    %v200 = vpop.f32.mrf.mxu0
    %v201 = vpop.f32.mrf.mxu0
    %v202 = vadd.f32 0.0, %v201
    %v203 = vpop.f32.mrf.mxu0
    %204 = vdwg.mxu0
    %v205 = vadd.f32 %v175, %v178
    %v206 = vadd.f32 %v205, %v183
    %v207 = vadd.f32 %v206, %v186
    %v208 = vadd.f32 %v207, %v191
    %v209 = vadd.f32 %v208, %v194
    %v210 = vadd.f32 %v209, %v199
    %v211 = vadd.f32 %v210, %v202
    %v212 = vrot.slane %v211, 4
    %v213 = vadd.f32 %v211, %v212
    %v214 = vrot.slane %v213, 2
    %v215 = vadd.f32 %v213, %v214
    %v216 = vrot.slane %v215, 1
    %v217 = vadd.f32 %v215, %v216
    %218 = vst [vmem:[#allocation8] sm:$0x1] %v217
    %v219 = vmul.f32 %v175, %v175
    %v220 = vmul.f32 %v178, %v178
    %v221 = vmul.f32 %v183, %v183
    %v222 = vmul.f32 %v186, %v186
    %v223 = vmul.f32 %v191, %v191
    %v224 = vmul.f32 %v194, %v194
    %v225 = vmul.f32 %v199, %v199
    %v226 = vmul.f32 %v202, %v202
    %v227 = vadd.f32 %v219, %v220
    %v228 = vadd.f32 %v227, %v221
    %v229 = vadd.f32 %v228, %v222
    %v230 = vadd.f32 %v229, %v223
    %v231 = vadd.f32 %v230, %v224
    %v232 = vadd.f32 %v231, %v225
    %v233 = vadd.f32 %v232, %v226
    %v234 = vrot.slane %v233, 4
    %v235 = vadd.f32 %v233, %v234
    %v236 = vrot.slane %v235, 2
    %v237 = vadd.f32 %v235, %v236
    %v238 = vrot.slane %v237, 1
    %v239 = vadd.f32 %v237, %v238
    %240 = vst [vmem:[#allocation8 + $0x1] sm:$0x1] %v239
    %v241 = vpack.c.bf16 %v178, %v175
    %v242 = vpack.c.bf16 %v186, %v183
    %v243 = vpack.c.bf16 %v194, %v191
    %v244 = vpack.c.bf16 %v202, %v199
    %v249 = vunpack.c.l.b16 %v241
    %v250 = vunpack.c.h.b16 %v241
    %v251 = vunpack.c.l.b16 %v242
    %v252 = vunpack.c.h.b16 %v242
    %v253 = vunpack.c.l.b16 %v243
    %v254 = vunpack.c.h.b16 %v243
    %v255 = vunpack.c.l.b16 %v244
    %v256 = vunpack.c.h.b16 %v244
    %v257 = vpack.c.b16 %v249, %v249
    %v258 = vpack.c.b16 %v250, %v250
    %v259 = vpack.c.b16 %v251, %v251
    %v260 = vpack.c.b16 %v252, %v252
    %v261 = vpack.c.b16 %v253, %v253
    %v262 = vpack.c.b16 %v254, %v254
    %v263 = vpack.c.b16 %v255, %v255
    %v264 = vpack.c.b16 %v256, %v256
    %273 = vst [vmem:[#allocation7] sm:$0xf] %v257
    %274 = vst [vmem:[#allocation7 + $0x4] sm:$0xf] %v258
    %275 = vst [vmem:[#allocation7 + $0x8] sm:$0xf] %v259
    %276 = vst [vmem:[#allocation7 + $0xc] sm:$0xf] %v260
    %277 = vst [vmem:[#allocation7 + $0x10] sm:$0xf] %v261
    %278 = vst [vmem:[#allocation7 + $0x14] sm:$0xf] %v262
    %279 = vst [vmem:[#allocation7 + $0x18] sm:$0xf] %v263
    %280 = vst [vmem:[#allocation7 + $0x1c] sm:$0xf] %v264
    // Predicated region
    $region18: #{tpu_custom_call.1} parent=1 // pred_check
      _
    $region19: #{tpu_custom_call.1} parent=1 // pred_check_branch
      %282 = sbr.rel (0) target = $region21
    $region20: #{tpu_custom_call.1} parent=1 // pred_region
      %s284 = ssub.s32 512, 512
      %285 = vsyncadd [#allocation4], %s284
      %s286 = sshll.u32 [#allocation7], 4
      %s287 = int_to_ptr.vmem [resolvable:$true] %s286
      %292 = dma.vmem_to_hbm [thread:$0]  %s287, 512, %s2, [#allocation4], 64, 64, 4
    $region21: #{tpu_custom_call.1} parent=1 // pred_fallthru
      _
    // Predicated region
    $region22: #{tpu_custom_call.1} parent=1 // pred_check
      _
    $region23: #{tpu_custom_call.1} parent=1 // pred_check_branch
      %294 = sbr.rel (0) target = $region25
    $region24: #{tpu_custom_call.1} parent=1 // pred_region
      %s296 = ssub.s32 32, 32
      %297 = vsyncadd [#allocation9], %s296
      %s299 = sshll.u32 [#allocation8], 4
      %s300 = int_to_ptr.vmem [resolvable:$true] %s299
      %302 = dma.vmem_to_hbm [thread:$0]  %s300, 32, %s3, [#allocation9]
    $region25: #{tpu_custom_call.1} parent=1 // pred_fallthru
      _
    // Predicated region
    $region26: #{tpu_custom_call.1} parent=1 // pred_check
      _
    $region27: #{tpu_custom_call.1} parent=1 // pred_check_branch
      %304 = sbr.rel (0) target = $region29
    $region28: #{tpu_custom_call.1} parent=1 // pred_region
      %305 = dma.done [#allocation4], 512
    $region29: #{tpu_custom_call.1} parent=1 // pred_fallthru
      _
    // Predicated region
    $region30: #{tpu_custom_call.1} parent=1 // pred_check
      _
    $region31: #{tpu_custom_call.1} parent=1 // pred_check_branch
      %307 = sbr.rel (0) target = $region33
    $region32: #{tpu_custom_call.1} parent=1 // pred_region
      %308 = dma.done [#allocation9], 32
    $region33: #{tpu_custom_call.1} parent=1 // pred_fallthru
      _
    %309 = vsyncpa [#allocation3], 1
    %310 = vsyncpa [#allocation6], 1
    %311 = vsyncpa [#allocation4], 1
    %312 = vsyncpa [#allocation9], 1

</llo_original>
